<compile_context>
chip_gen: v6e
topology: v6e:2x2x1
jax: 0.10.0
libtpu: 0.0.40
codegen_flags: <defaults>
</compile_context>

<pallas_src>
import functools

import numpy as np
import jax
import jax.numpy as jnp
from jax.experimental import pallas as pl
from jax.experimental.pallas import tpu as pltpu


def _round_up(v, m):
    return ((v + m - 1) // m) * m


def _pick_tiles(n):
    """Return (tm, tk, Np). tm | Np and tk | Np always hold."""
    if n <= 512:
        t = _round_up(max(n, 128), 128)
        return t, t, t                      # single tile, grid (1, 1)
    tm = 512                                # keep >=2 row tiles for 2-TC v7x
    tk = 2048 if n >= 2048 else 512         # big k tile -> ~4 MiB of A per step
    return tm, tk, _round_up(n, tk)


# ---------------------------------------------------------------------------
# Pass 1: H1 = relu( A' @ Y1 + b1 ),  Y1 = X @ W1  (precomputed, bf16 stream)
# grid = (row_tiles, k_tiles); acc (tm, Cp) f32 scratch accumulates over k.
# ---------------------------------------------------------------------------
def gin_layer_kernel(a_ref, y_ref, b_ref, h_ref, acc_ref, *, tk, resident, relu):
    k = pl.program_id(1)

    @pl.when(k == 0)
    def _init():
        acc_ref[...] = jnp.zeros_like(acc_ref)

    if resident:
        start = pl.multiple_of(k * tk, tk)
        yk = y_ref[pl.ds(start, tk), :]         # slice the resident k-stream
    else:
        yk = y_ref[...]
    # bf16 x bf16 -> f32 accumulate on the MXU
    acc_ref[...] += jnp.dot(a_ref[...], yk, preferred_element_type=jnp.float32)

    @pl.when(k == pl.num_programs(1) - 1)
    def _finalize():
        h = acc_ref[...] + b_ref[...]
        if relu:
            h = jnp.maximum(h, 0.0)
        h_ref[...] = h.astype(h_ref.dtype)


# ---------------------------------------------------------------------------
# Pass 2: H2 = A' @ Y2 + b2,  Y2 = H1 @ W2; pooled partial = P[:, tile_i] @ H2
# Output written only at k == last (correct: output block index changes with i
# only, so writeback happens after the final k step of each row tile).
# ---------------------------------------------------------------------------
def gin_layer_pool_kernel(a_ref, y_ref, b_ref, p_ref, o_ref, acc_ref, *,
                          tk, resident):
    k = pl.program_id(1)

    @pl.when(k == 0)
    def _init():
        acc_ref[...] = jnp.zeros_like(acc_ref)

    if resident:
        start = pl.multiple_of(k * tk, tk)
        yk = y_ref[pl.ds(start, tk), :]
    else:
        yk = y_ref[...]
    acc_ref[...] += jnp.dot(a_ref[...], yk, preferred_element_type=jnp.float32)

    @pl.when(k == pl.num_programs(1) - 1)
    def _finalize():
        h2 = acc_ref[...] + b_ref[...]
        # fold SumPooling: contribution of this node-row tile to every graph.
        # P's zero columns for padded nodes double as the node-validity mask.
        o_ref[0] = jnp.dot(p_ref[...], h2, preferred_element_type=jnp.float32)


def gin_forward(edges_src, edges_dst, graph_ids, feats, params):
    """feats: (N, input_size) float32; edge j->i means src=j, dst=i;
    graph_ids: (N,) int graph membership."""
    N, _ = feats.shape
    C = params["w1"].shape[1]
    G = int(np.max(np.asarray(graph_ids))) + 1

    tm, tk, Np = _pick_tiles(N)
    Cp = _round_up(max(C, 128), 128)
    Gp = _round_up(max(G, 8), 8)
    nrt, nkt = Np // tm, Np // tk

    src = jnp.asarray(edges_src, jnp.int32)
    dst = jnp.asarray(edges_dst, jnp.int32)
    gid = jnp.asarray(graph_ids, jnp.int32)
    diag = jnp.arange(N, dtype=jnp.int32)

    # A' = A + (1+eps)*I (eps = 0), built directly in bf16 (no f32 N^2
    # intermediate).  Edge multiplicities and the diagonal are small integers,
    # exact in bf16.  Valid rows never reference padded columns.
    A = (jnp.zeros((Np, Np), jnp.bfloat16)
         .at[dst, src].add(jnp.ones(src.shape, jnp.bfloat16))
         .at[diag, diag].add(jnp.ones((N,), jnp.bfloat16)))

    # Pooling membership matrix (G, N); padded-node columns stay zero.
    P = jnp.zeros((Gp, Np), jnp.float32).at[gid, jnp.arange(N)].add(1.0)

    W1 = params["w1"].astype(jnp.float32)
    W2 = jnp.pad(params["w2"].astype(jnp.float32), ((0, Cp - C), (0, Cp - C)))
    b1 = jnp.pad(params["b1"].astype(jnp.float32).reshape(1, -1),
                 ((0, 0), (0, Cp - C)))
    b2 = jnp.pad(params["b2"].astype(jnp.float32).reshape(1, -1),
                 ((0, 0), (0, Cp - C)))

    # Hoist Linear1 through the aggregation: Y1 = X @ W1 (tiny XLA matmul).
    Y1 = feats.astype(jnp.float32) @ W1
    Y1 = jnp.pad(Y1, ((0, Np - N), (0, Cp - C))).astype(jnp.bfloat16)

    # Keep the bf16 k-stream fully VMEM-resident when small enough; this
    # removes its re-streaming once per row tile (~30% of non-A traffic).
    resident = (Np * Cp * 2) <= (8 << 20)
    y_spec = (pl.BlockSpec((Np, Cp), lambda i, k: (0, 0)) if resident
              else pl.BlockSpec((tk, Cp), lambda i, k: (k, 0)))

    cparams = pltpu.CompilerParams(
        dimension_semantics=("parallel", "arbitrary"),
        # Working set (A double-buffer + resident Y + acc) stays well below
        # 48 MiB for these tile choices; 48 MiB is under v7x's 64 MiB VMEM and
        # comfortably inside v5e/v6e's 128 MiB.
        vmem_limit_bytes=48 * 1024 * 1024,
    )

    # ---- pass 1: H1 = relu(A' @ Y1 + b1) ----
    h1 = pl.pallas_call(
        functools.partial(gin_layer_kernel, tk=tk, resident=resident, relu=True),
        out_shape=jax.ShapeDtypeStruct((Np, Cp), jnp.float32),
        grid=(nrt, nkt),
        in_specs=[
            pl.BlockSpec((tm, tk), lambda i, k: (i, k)),   # A' tile (bf16)
            y_spec,                                        # Y1 (bf16)
            pl.BlockSpec((1, Cp), lambda i, k: (0, 0)),    # b1
        ],
        out_specs=pl.BlockSpec((tm, Cp), lambda i, k: (i, 0)),
        scratch_shapes=[pltpu.VMEM((tm, Cp), jnp.float32)],
        compiler_params=cparams,
    )(A, Y1, b1)

    # Hoist Linear2: Y2 = H1 @ W2 (tiny XLA matmul), then pass 2 aggregates,
    # adds b2 and folds SumPooling into per-row-tile (G, C) partials.
    Y2 = (h1 @ W2).astype(jnp.bfloat16)

    partial = pl.pallas_call(
        functools.partial(gin_layer_pool_kernel, tk=tk, resident=resident),
        out_shape=jax.ShapeDtypeStruct((nrt, Gp, Cp), jnp.float32),
        grid=(nrt, nkt),
        in_specs=[
            pl.BlockSpec((tm, tk), lambda i, k: (i, k)),   # A' tile (bf16)
            y_spec,                                        # Y2 (bf16)
            pl.BlockSpec((1, Cp), lambda i, k: (0, 0)),    # b2
            pl.BlockSpec((Gp, tm), lambda i, k: (0, i)),   # pooling cols, tile i
        ],
        out_specs=pl.BlockSpec((1, Gp, Cp), lambda i, k: (i, 0, 0)),
        scratch_shapes=[pltpu.VMEM((tm, Cp), jnp.float32)],
        compiler_params=cparams,
    )(A, Y2, b2, P)

    out = jnp.sum(partial, axis=0)          # tiny (nrt, G, C) reduce
    return out[:G, :C]


def gin_reference(A, P, feats, params):
    """Pure-JAX f32 reference."""
    h = jnp.dot(feats + A @ feats, params["w1"]) + params["b1"]
    h = jnp.maximum(h, 0.0)
    h = jnp.dot(h + A @ h, params["w2"]) + params["b2"]
    return P @ h


if __name__ == "__main__":
    # Small synthetic batched graph: 2 graphs x 8 nodes, bidirectional ring each.
    input_size, num_classes = 1, 2
    nodes_per_graph, num_graphs = 8, 2
    N = nodes_per_graph * num_graphs

    src, dst, gids = [], [], []
    for g in range(num_graphs):
        base = g * nodes_per_graph
        for i in range(nodes_per_graph):
            j = (i + 1) % nodes_per_graph
            src += [base + i, base + j]
            dst += [base + j, base + i]
        gids += [g] * nodes_per_graph
    src = np.array(src, np.int32)
    dst = np.array(dst, np.int32)
    gids = np.array(gids, np.int32)

    key = jax.random.PRNGKey(0)
    k1, k2, k3, k4, k5 = jax.random.split(key, 5)
    params = {
        "w1": jax.random.normal(k1, (input_size, num_classes), jnp.float32) * 0.5,
        "b1": jax.random.normal(k2, (num_classes,), jnp.float32) * 0.1,
        "w2": jax.random.normal(k3, (num_classes, num_classes), jnp.float32) * 0.5,
        "b2": jax.random.normal(k4, (num_classes,), jnp.float32) * 0.1,
    }
    feats = jax.random.normal(k5, (N, input_size), jnp.float32)

    out = gin_forward(src, dst, gids, feats, params)
    out = jax.block_until_ready(out)

    # Reference (unpadded dense graph ops in plain f32 JAX).
    A_ref = np.zeros((N, N), np.float32)
    np.add.at(A_ref, (dst, src), 1.0)
    P_ref = np.zeros((num_graphs, N), np.float32)
    P_ref[gids, np.arange(N)] = 1.0
    ref = gin_reference(jnp.asarray(A_ref), jnp.asarray(P_ref), feats, params)

    assert out.shape == (num_graphs, num_classes), out.shape
    # Tolerance reflects bf16 MXU operands in the aggregation streams.
    np.testing.assert_allclose(np.asarray(out), np.asarray(ref),
                               rtol=5e-2, atol=5e-2)
    print("KERNEL_OK")
</pallas_src>

<mosaic_0001>
module attributes {stable_mosaic.version = 11 : i64} {
  func.func @gin_layer_kernel(%arg0: i32, %arg1: i32, %arg2: memref<128x128xbf16, #tpu.memory_space<vmem>>, %arg3: memref<128x128xbf16, #tpu.memory_space<vmem>>, %arg4: memref<1x128xf32, #tpu.memory_space<vmem>>, %arg5: memref<128x128xf32, #tpu.memory_space<vmem>>, %arg6: memref<128x128xf32, #tpu.memory_space<vmem>>) attributes {dimension_semantics = [#tpu.dimension_semantics<parallel>, #tpu.dimension_semantics<arbitrary>], iteration_bounds = array<i64: 1, 1>, scalar_prefetch = 0 : i64, scratch_operands = 1 : i64, tpu.core_type = #tpu.core_type<tc>, window_params = [{transform_indices = @transform_0, window_bounds = array<i64: 128, 128>}, {pipeline_mode = #tpu.pipeline_mode<synchronous>, transform_indices = @transform_1, window_bounds = array<i64: 128, 128>}, {pipeline_mode = #tpu.pipeline_mode<synchronous>, transform_indices = @transform_2, window_bounds = array<i64: 1, 128>}, {transform_indices = @transform_3, window_bounds = array<i64: 128, 128>}]} {
    %c0_i32 = arith.constant 0 : i32
    %0 = arith.cmpi eq, %arg1, %c0_i32 : i32
    %1 = arith.extui %0 : i1 to i32
    %c0_i32_0 = arith.constant 0 : i32
    %2 = arith.cmpi ne, %1, %c0_i32_0 : i32
    scf.if %2 {
      %cst_9 = arith.constant 0.000000e+00 : f32
      %15 = vector.broadcast %cst_9 : f32 to vector<128x128xf32>
      %c0_10 = arith.constant 0 : index
      %c0_11 = arith.constant 0 : index
      %16 = vector.load %arg6[%c0_10, %c0_11] : memref<128x128xf32, #tpu.memory_space<vmem>>, vector<128x128xf32>
      tpu.vector_store %arg6[%c0_10, %c0_11], %15 {strides = array<i32>} : memref<128x128xf32, #tpu.memory_space<vmem>>, vector<128x128xf32>,
    } else {
    }
    %c128_i32 = arith.constant 128 : i32
    %3 = arith.muli %arg1, %c128_i32 : i32
    %4 = tpu.assume_multiple %3, 128 : i32
    %5 = arith.index_cast %4 : i32 to index
    %c0 = arith.constant 0 : index
    %6 = vector.load %arg3[%5, %c0] : memref<128x128xbf16, #tpu.memory_space<vmem>>, vector<128x128xbf16>
    %c0_1 = arith.constant 0 : index
    %c0_2 = arith.constant 0 : index
    %7 = vector.load %arg6[%c0_1, %c0_2] : memref<128x128xf32, #tpu.memory_space<vmem>>, vector<128x128xf32>
    %c0_3 = arith.constant 0 : index
    %c0_4 = arith.constant 0 : index
    %8 = vector.load %arg2[%c0_3, %c0_4] : memref<128x128xbf16, #tpu.memory_space<vmem>>, vector<128x128xbf16>
    %cst = arith.constant dense<0.000000e+00> : vector<128x128xf32>
    %9 = tpu.matmul %8, %6, %cst {dimension_numbers = #tpu.dot_dimension_numbers<[1], [0], [0], [1], [0, 0, 1, 1], [], []>} : vector<128x128xbf16>, vector<128x128xbf16>, vector<128x128xf32> -> vector<128x128xf32>
    %10 = arith.addf %7, %9 : vector<128x128xf32>
    %c0_5 = arith.constant 0 : index
    %c0_6 = arith.constant 0 : index
    %11 = vector.load %arg6[%c0_5, %c0_6] : memref<128x128xf32, #tpu.memory_space<vmem>>, vector<128x128xf32>
    tpu.vector_store %arg6[%c0_5, %c0_6], %10 {strides = array<i32>} : memref<128x128xf32, #tpu.memory_space<vmem>>, vector<128x128xf32>,
    %c0_i32_7 = arith.constant 0 : i32
    %12 = arith.cmpi eq, %arg1, %c0_i32_7 : i32
    %13 = arith.extui %12 : i1 to i32
    %c0_i32_8 = arith.constant 0 : i32
    %14 = arith.cmpi ne, %13, %c0_i32_8 : i32
    scf.if %14 {
      %c0_9 = arith.constant 0 : index
      %c0_10 = arith.constant 0 : index
      %15 = vector.load %arg6[%c0_9, %c0_10] : memref<128x128xf32, #tpu.memory_space<vmem>>, vector<128x128xf32>
      %c0_11 = arith.constant 0 : index
      %c0_12 = arith.constant 0 : index
      %16 = vector.load %arg4[%c0_11, %c0_12] : memref<1x128xf32, #tpu.memory_space<vmem>>, vector<1x128xf32>
      %17 = vector.broadcast %16 : vector<1x128xf32> to vector<128x128xf32>
      %18 = arith.addf %15, %17 : vector<128x128xf32>
      %cst_13 = arith.constant 0.000000e+00 : f32
      %19 = vector.broadcast %cst_13 : f32 to vector<128x128xf32>
      %20 = arith.maximumf %18, %19 : vector<128x128xf32>
      %c0_14 = arith.constant 0 : index
      %c0_15 = arith.constant 0 : index
      %21 = vector.load %arg5[%c0_14, %c0_15] : memref<128x128xf32, #tpu.memory_space<vmem>>, vector<128x128xf32>
      tpu.vector_store %arg5[%c0_14, %c0_15], %20 {strides = array<i32>} : memref<128x128xf32, #tpu.memory_space<vmem>>, vector<128x128xf32>,
    } else {
    }
    return
  }
  func.func @transform_0(%arg0: i32, %arg1: i32) -> (i32, i32) {
    %c0_i32 = arith.constant 0 : i32
    return %arg0, %arg1 : i32, i32
  }
  func.func @transform_1(%arg0: i32, %arg1: i32) -> (i32, i32) {
    %c0_i32 = arith.constant 0 : i32
    %c0_i32_0 = arith.constant 0 : i32
    %c0_i32_1 = arith.constant 0 : i32
    return %c0_i32, %c0_i32_0 : i32, i32
  }
  func.func @transform_2(%arg0: i32, %arg1: i32) -> (i32, i32) {
    %c0_i32 = arith.constant 0 : i32
    %c0_i32_0 = arith.constant 0 : i32
    %c0_i32_1 = arith.constant 0 : i32
    return %c0_i32, %c0_i32_0 : i32, i32
  }
  func.func @transform_3(%arg0: i32, %arg1: i32) -> (i32, i32) {
    %c0_i32 = arith.constant 0 : i32
    %c0_i32_0 = arith.constant 0 : i32
    return %arg0, %c0_i32 : i32, i32
  }
}

</mosaic_0001>

<llo_original>
// kernel: tpu_custom_call.1
$region0: #{tpu_custom_call.1}
  #allocation0 [shape = 'u32[]', space=smem, size = 0x4, offset = 0x4, fixed_abs, tag = 'smem constant byte address 0x4 - core index']
  #allocation1 [shape = 'u32[144,128]{1,0:T(1,128)}', space=vmem, size = 0x12000, scoped, tag = 'internal scratch']
  #allocation2 [shape = 'f32[128,128]{1,0:T(8,128)}', space=vmem, size = 0x10000, scoped, tag = 'scratch operand']
  %s0 = inlined_call_operand.hbm [shape: bf16[128,128], index: 0, kind: input, shape index: {}]
  %s1 = inlined_call_operand.hbm [shape: bf16[128,128], index: 1, kind: input, shape index: {}]
  %s2 = inlined_call_operand.vmem [shape: f32[1,128], index: 2, kind: input, shape index: {}]
  %s3 = inlined_call_operand.hbm [shape: f32[128,128], index: 3, kind: output, shape index: {}]
  %s4 = sld [smem:[#allocation0]]
  $region38: #{tpu_custom_call.1} parent=0
    _
  %s6 = ssub.s32 1, %s4
  %s7 = scalar_select 0, %s6, %s4
  $region1: #{tpu_custom_call.1} parent=0
    #allocation3 [shape = 'u8[32768]{0}', space=vmem, size = 0x8000, scoped, tag = 'input window, operand 0, single buffered']
    #allocation4 [shape = 's32[1]{0}', space=sflag, size = 0x4, scoped, tag = 'scoped memory for tpu_custom_call.1']
    #allocation5 [shape = 's32[1]{0}', space=sflag, size = 0x4, scoped, tag = 'scoped memory for tpu_custom_call.1']
    #allocation6 [shape = 'u8[32768]{0}', space=vmem, size = 0x8000, scoped, tag = 'input window, operand 1, single buffered']
    #allocation7 [shape = 's32[1]{0}', space=sflag, size = 0x4, scoped, tag = 'scoped memory for tpu_custom_call.1']
    #allocation8 [shape = 'u8[65536]{0}', space=vmem, size = 0x10000, scoped, tag = 'output window, operand 0, single buffered']
    %8 = vsyncpa [#allocation4], 0
    %9 = vsyncpa [#allocation7], 0
    %10 = vsyncpa [#allocation5], 0
    // Predicated region
    $region2: #{tpu_custom_call.1} parent=1 // pred_check
      _
    $region3: #{tpu_custom_call.1} parent=1 // pred_check_branch
      %12 = sbr.rel (0) target = $region5
    $region4: #{tpu_custom_call.1} parent=1 // pred_region
      %s14 = ssub.s32 1024, 1024
      %15 = vsyncadd [#allocation4], %s14
      %s16 = sshll.u32 [#allocation3], 4
      %s17 = int_to_ptr.vmem [resolvable:$true] %s16
      %22 = dma.hbm_to_vmem [thread:$0]  %s0, 1024, %s17, [#allocation4], 64, 64, 4
    $region5: #{tpu_custom_call.1} parent=1 // pred_fallthru
      _
    // Predicated region
    $region6: #{tpu_custom_call.1} parent=1 // pred_check
      _
    $region7: #{tpu_custom_call.1} parent=1 // pred_check_branch
      %24 = sbr.rel (0) target = $region9
    $region8: #{tpu_custom_call.1} parent=1 // pred_region
      %s26 = ssub.s32 1024, 1024
      %27 = vsyncadd [#allocation7], %s26
      %s28 = sshll.u32 [#allocation6], 4
      %s29 = int_to_ptr.vmem [resolvable:$true] %s28
      %34 = dma.hbm_to_vmem [thread:$0]  %s1, 1024, %s29, [#allocation7], 64, 64, 4
    $region9: #{tpu_custom_call.1} parent=1 // pred_fallthru
      _
    // Predicated region
    $region10: #{tpu_custom_call.1} parent=1 // pred_check
      _
    $region11: #{tpu_custom_call.1} parent=1 // pred_check_branch
      %36 = sbr.rel (0) target = $region13
    $region12: #{tpu_custom_call.1} parent=1 // pred_region
      _
    $region13: #{tpu_custom_call.1} parent=1 // pred_fallthru
      _
    // Predicated region
    $region14: #{tpu_custom_call.1} parent=1 // pred_check
      _
    $region15: #{tpu_custom_call.1} parent=1 // pred_check_branch
      %38 = sbr.rel (0) target = $region17
    $region16: #{tpu_custom_call.1} parent=1 // pred_region
      %39 = dma.done [#allocation4], 1024
    $region17: #{tpu_custom_call.1} parent=1 // pred_fallthru
      _
    // Predicated region
    $region18: #{tpu_custom_call.1} parent=1 // pred_check
      _
    $region19: #{tpu_custom_call.1} parent=1 // pred_check_branch
      %41 = sbr.rel (0) target = $region21
    $region20: #{tpu_custom_call.1} parent=1 // pred_region
      %42 = dma.done [#allocation7], 1024
    $region21: #{tpu_custom_call.1} parent=1 // pred_fallthru
      _
    %p44 = scmp.eq.s32.totalorder 0, 0
    // Predicated region
    $region22: #{tpu_custom_call.1} parent=1 // pred_check
      %p45 = pneg %p44
    $region23: #{tpu_custom_call.1} parent=1 // pred_check_branch
      %47 = sbr.rel (%p45) target = $region25
    $region24: #{tpu_custom_call.1} parent=1 // pred_region
      %48 = vst [vmem:[#allocation2] sm:$0xff] 0.0
      %49 = vst [vmem:[#allocation2 + $0x8] sm:$0xff] 0.0
      %50 = vst [vmem:[#allocation2 + $0x10] sm:$0xff] 0.0
      %51 = vst [vmem:[#allocation2 + $0x18] sm:$0xff] 0.0
      %52 = vst [vmem:[#allocation2 + $0x20] sm:$0xff] 0.0
      %53 = vst [vmem:[#allocation2 + $0x28] sm:$0xff] 0.0
      %54 = vst [vmem:[#allocation2 + $0x30] sm:$0xff] 0.0
      %55 = vst [vmem:[#allocation2 + $0x38] sm:$0xff] 0.0
      %56 = vst [vmem:[#allocation2 + $0x40] sm:$0xff] 0.0
      %57 = vst [vmem:[#allocation2 + $0x48] sm:$0xff] 0.0
      %58 = vst [vmem:[#allocation2 + $0x50] sm:$0xff] 0.0
      %59 = vst [vmem:[#allocation2 + $0x58] sm:$0xff] 0.0
      %60 = vst [vmem:[#allocation2 + $0x60] sm:$0xff] 0.0
      %61 = vst [vmem:[#allocation2 + $0x68] sm:$0xff] 0.0
      %62 = vst [vmem:[#allocation2 + $0x70] sm:$0xff] 0.0
      %63 = vst [vmem:[#allocation2 + $0x78] sm:$0xff] 0.0
    $region25: #{tpu_custom_call.1} parent=1 // pred_fallthru
      _
    %s64 = smul.u32 0, 128
    %s65 = sshra.s32 %s64, 3
    %s66 = sand.u32 %s64, 7
    %s67 = smul.addr %s65, 4
    %s68 = scalar_lea.vmem [#allocation6], %s67
    %v69 = vld [vmem:[%s68] sm:$0xf]
    %v70 = vld [vmem:[%s68 + $0x4] sm:$0xf]
    %v71 = vld [vmem:[%s68 + $0x8] sm:$0xf]
    %v72 = vld [vmem:[%s68 + $0xc] sm:$0xf]
    %v73 = vld [vmem:[%s68 + $0x10] sm:$0xf]
    %v74 = vld [vmem:[%s68 + $0x14] sm:$0xf]
    %v75 = vld [vmem:[%s68 + $0x18] sm:$0xf]
    %v76 = vld [vmem:[%s68 + $0x1c] sm:$0xf]
    %v77 = vld [vmem:[%s68 + $0x20] sm:$0xf]
    %v78 = vld [vmem:[%s68 + $0x24] sm:$0xf]
    %v79 = vld [vmem:[%s68 + $0x28] sm:$0xf]
    %v80 = vld [vmem:[%s68 + $0x2c] sm:$0xf]
    %v81 = vld [vmem:[%s68 + $0x30] sm:$0xf]
    %v82 = vld [vmem:[%s68 + $0x34] sm:$0xf]
    %v83 = vld [vmem:[%s68 + $0x38] sm:$0xf]
    %v84 = vld [vmem:[%s68 + $0x3c] sm:$0xf]
    %v85 = vld [vmem:[#allocation2] sm:$0xff]
    %v86 = vld [vmem:[#allocation2 + $0x8] sm:$0xff]
    %v87 = vld [vmem:[#allocation2 + $0x10] sm:$0xff]
    %v88 = vld [vmem:[#allocation2 + $0x18] sm:$0xff]
    %v89 = vld [vmem:[#allocation2 + $0x20] sm:$0xff]
    %v90 = vld [vmem:[#allocation2 + $0x28] sm:$0xff]
    %v91 = vld [vmem:[#allocation2 + $0x30] sm:$0xff]
    %v92 = vld [vmem:[#allocation2 + $0x38] sm:$0xff]
    %v93 = vld [vmem:[#allocation2 + $0x40] sm:$0xff]
    %v94 = vld [vmem:[#allocation2 + $0x48] sm:$0xff]
    %v95 = vld [vmem:[#allocation2 + $0x50] sm:$0xff]
    %v96 = vld [vmem:[#allocation2 + $0x58] sm:$0xff]
    %v97 = vld [vmem:[#allocation2 + $0x60] sm:$0xff]
    %v98 = vld [vmem:[#allocation2 + $0x68] sm:$0xff]
    %v99 = vld [vmem:[#allocation2 + $0x70] sm:$0xff]
    %v100 = vld [vmem:[#allocation2 + $0x78] sm:$0xff]
    %v101 = vld [vmem:[#allocation3] sm:$0xf]
    %v102 = vld [vmem:[#allocation3 + $0x4] sm:$0xf]
    %v103 = vld [vmem:[#allocation3 + $0x8] sm:$0xf]
    %v104 = vld [vmem:[#allocation3 + $0xc] sm:$0xf]
    %v105 = vld [vmem:[#allocation3 + $0x10] sm:$0xf]
    %v106 = vld [vmem:[#allocation3 + $0x14] sm:$0xf]
    %v107 = vld [vmem:[#allocation3 + $0x18] sm:$0xf]
    %v108 = vld [vmem:[#allocation3 + $0x1c] sm:$0xf]
    %v109 = vld [vmem:[#allocation3 + $0x20] sm:$0xf]
    %v110 = vld [vmem:[#allocation3 + $0x24] sm:$0xf]
    %v111 = vld [vmem:[#allocation3 + $0x28] sm:$0xf]
    %v112 = vld [vmem:[#allocation3 + $0x2c] sm:$0xf]
    %v113 = vld [vmem:[#allocation3 + $0x30] sm:$0xf]
    %v114 = vld [vmem:[#allocation3 + $0x34] sm:$0xf]
    %v115 = vld [vmem:[#allocation3 + $0x38] sm:$0xf]
    %v116 = vld [vmem:[#allocation3 + $0x3c] sm:$0xf]
    %v133 = vunpack.c.l.b16 %v101
    %v134 = vunpack.c.l.b16 %v102
    %v135 = vunpack.c.l.b16 %v103
    %v136 = vunpack.c.l.b16 %v104
    %v137 = vunpack.c.l.b16 %v105
    %v138 = vunpack.c.l.b16 %v106
    %v139 = vunpack.c.l.b16 %v107
    %v140 = vunpack.c.l.b16 %v108
    %v141 = vunpack.c.l.b16 %v109
    %v142 = vunpack.c.l.b16 %v110
    %v143 = vunpack.c.l.b16 %v111
    %v144 = vunpack.c.l.b16 %v112
    %v145 = vunpack.c.l.b16 %v113
    %v146 = vunpack.c.l.b16 %v114
    %v147 = vunpack.c.l.b16 %v115
    %v148 = vunpack.c.l.b16 %v116
    %v149 = vpack.c.b16 %v134, %v133
    %v150 = vpack.c.b16 %v136, %v135
    %v151 = vpack.c.b16 %v138, %v137
    %v152 = vpack.c.b16 %v140, %v139
    %v153 = vpack.c.b16 %v142, %v141
    %v154 = vpack.c.b16 %v144, %v143
    %v155 = vpack.c.b16 %v146, %v145
    %v156 = vpack.c.b16 %v148, %v147
    %v181 = vunpack.c.l.b16 %v69
    %v182 = vunpack.c.l.b16 %v70
    %v183 = vunpack.c.l.b16 %v71
    %v184 = vunpack.c.l.b16 %v72
    %v185 = vunpack.c.l.b16 %v73
    %v186 = vunpack.c.l.b16 %v74
    %v187 = vunpack.c.l.b16 %v75
    %v188 = vunpack.c.l.b16 %v76
    %v189 = vunpack.c.l.b16 %v77
    %v190 = vunpack.c.l.b16 %v78
    %v191 = vunpack.c.l.b16 %v79
    %v192 = vunpack.c.l.b16 %v80
    %v193 = vunpack.c.l.b16 %v81
    %v194 = vunpack.c.l.b16 %v82
    %v195 = vunpack.c.l.b16 %v83
    %v196 = vunpack.c.l.b16 %v84
    %v197 = vpack.c.b16 %v182, %v181
    %v198 = vpack.c.b16 %v184, %v183
    %v199 = vpack.c.b16 %v186, %v185
    %v200 = vpack.c.b16 %v188, %v187
    %v201 = vpack.c.b16 %v190, %v189
    %v202 = vpack.c.b16 %v192, %v191
    %v203 = vpack.c.b16 %v194, %v193
    %v204 = vpack.c.b16 %v196, %v195
    %213 = vmatprep.subr.bf16.mxu0 0
    %214 = vmatpush1.bf16.msra.mxu0 %v204
    %215 = vmatprep.subr.bf16.mxu0 0
    %216 = vmatpush1.bf16.msra.mxu0 %v203
    %217 = vmatprep.subr.bf16.mxu0 0
    %218 = vmatpush1.bf16.msra.mxu0 %v202
    %219 = vmatprep.subr.bf16.mxu0 0
    %220 = vmatpush1.bf16.msra.mxu0 %v201
    %221 = vmatprep.subr.bf16.mxu0 0
    %222 = vmatpush1.bf16.msra.mxu0 %v200
    %223 = vmatprep.subr.bf16.mxu0 0
    %224 = vmatpush1.bf16.msra.mxu0 %v199
    %225 = vmatprep.subr.bf16.mxu0 0
    %226 = vmatpush1.bf16.msra.mxu0 %v198
    %227 = vmatprep.subr.bf16.mxu0 0
    %228 = vmatpush1.bf16.msra.mxu0 %v197
    %229 = vmatprep.subr.bf16.mxu0 0
    %230 = vmatpush2.bf16.msra.mxu0 0
    %231 = vmatprep.subr.bf16.mxu0 0
    %232 = vmatpush2.bf16.msra.mxu0 0
    %233 = vmatprep.subr.bf16.mxu0 0
    %234 = vmatpush2.bf16.msra.mxu0 0
    %235 = vmatprep.subr.bf16.mxu0 0
    %236 = vmatpush2.bf16.msra.mxu0 0
    %237 = vmatprep.subr.bf16.mxu0 0
    %238 = vmatpush2.bf16.msra.mxu0 0
    %239 = vmatprep.subr.bf16.mxu0 0
    %240 = vmatpush2.bf16.msra.mxu0 0
    %241 = vmatprep.subr.bf16.mxu0 0
    %242 = vmatpush2.bf16.msra.mxu0 0
    %243 = vmatprep.subr.bf16.mxu0 0
    %244 = vmatpush2.bf16.msra.mxu0 0
    %245 = vmatprep.mubr.bf16.mxu0 0
    %246 = vmatmul.mubr.bf16.gmra.mxu0 %v149
    %v247 = vpop.f32.mrf.mxu0
    %v248 = vadd.f32 0.0, %v247
    %v249 = vpop.f32.mrf.mxu0
    %v250 = vpop.f32.mrf.mxu0
    %v251 = vadd.f32 0.0, %v250
    %v252 = vpop.f32.mrf.mxu0
    %253 = vmatprep.mubr.bf16.mxu0 0
    %254 = vmatmul.mubr.bf16.gmra.mxu0 %v150
    %v255 = vpop.f32.mrf.mxu0
    %v256 = vadd.f32 0.0, %v255
    %v257 = vpop.f32.mrf.mxu0
    %v258 = vpop.f32.mrf.mxu0
    %v259 = vadd.f32 0.0, %v258
    %v260 = vpop.f32.mrf.mxu0
    %261 = vmatprep.mubr.bf16.mxu0 0
    %262 = vmatmul.mubr.bf16.gmra.mxu0 %v151
    %v263 = vpop.f32.mrf.mxu0
    %v264 = vadd.f32 0.0, %v263
    %v265 = vpop.f32.mrf.mxu0
    %v266 = vpop.f32.mrf.mxu0
    %v267 = vadd.f32 0.0, %v266
    %v268 = vpop.f32.mrf.mxu0
    %269 = vmatprep.mubr.bf16.mxu0 0
    %270 = vmatmul.mubr.bf16.gmra.mxu0 %v152
    %v271 = vpop.f32.mrf.mxu0
    %v272 = vadd.f32 0.0, %v271
    %v273 = vpop.f32.mrf.mxu0
    %v274 = vpop.f32.mrf.mxu0
    %v275 = vadd.f32 0.0, %v274
    %v276 = vpop.f32.mrf.mxu0
    %277 = vmatprep.mubr.bf16.mxu0 0
    %278 = vmatmul.mubr.bf16.gmra.mxu0 %v153
    %v279 = vpop.f32.mrf.mxu0
    %v280 = vadd.f32 0.0, %v279
    %v281 = vpop.f32.mrf.mxu0
    %v282 = vpop.f32.mrf.mxu0
    %v283 = vadd.f32 0.0, %v282
    %v284 = vpop.f32.mrf.mxu0
    %285 = vmatprep.mubr.bf16.mxu0 0
    %286 = vmatmul.mubr.bf16.gmra.mxu0 %v154
    %v287 = vpop.f32.mrf.mxu0
    %v288 = vadd.f32 0.0, %v287
    %v289 = vpop.f32.mrf.mxu0
    %v290 = vpop.f32.mrf.mxu0
    %v291 = vadd.f32 0.0, %v290
    %v292 = vpop.f32.mrf.mxu0
    %293 = vmatprep.mubr.bf16.mxu0 0
    %294 = vmatmul.mubr.bf16.gmra.mxu0 %v155
    %v295 = vpop.f32.mrf.mxu0
    %v296 = vadd.f32 0.0, %v295
    %v297 = vpop.f32.mrf.mxu0
    %v298 = vpop.f32.mrf.mxu0
    %v299 = vadd.f32 0.0, %v298
    %v300 = vpop.f32.mrf.mxu0
    %301 = vmatprep.mubr.bf16.mxu0 0
    %302 = vmatmul.mubr.bf16.gmra.mxu0 %v156
    %v303 = vpop.f32.mrf.mxu0
    %v304 = vadd.f32 0.0, %v303
    %v305 = vpop.f32.mrf.mxu0
    %v306 = vpop.f32.mrf.mxu0
    %v307 = vadd.f32 0.0, %v306
    %v308 = vpop.f32.mrf.mxu0
    %309 = vdwg.mxu0
    %v310 = vadd.f32 %v85, %v248
    %v311 = vadd.f32 %v86, %v251
    %v312 = vadd.f32 %v87, %v256
    %v313 = vadd.f32 %v88, %v259
    %v314 = vadd.f32 %v89, %v264
    %v315 = vadd.f32 %v90, %v267
    %v316 = vadd.f32 %v91, %v272
    %v317 = vadd.f32 %v92, %v275
    %v318 = vadd.f32 %v93, %v280
    %v319 = vadd.f32 %v94, %v283
    %v320 = vadd.f32 %v95, %v288
    %v321 = vadd.f32 %v96, %v291
    %v322 = vadd.f32 %v97, %v296
    %v323 = vadd.f32 %v98, %v299
    %v324 = vadd.f32 %v99, %v304
    %v325 = vadd.f32 %v100, %v307
    %326 = vst [vmem:[#allocation2] sm:$0xff] %v310
    %327 = vst [vmem:[#allocation2 + $0x8] sm:$0xff] %v311
    %328 = vst [vmem:[#allocation2 + $0x10] sm:$0xff] %v312
    %329 = vst [vmem:[#allocation2 + $0x18] sm:$0xff] %v313
    %330 = vst [vmem:[#allocation2 + $0x20] sm:$0xff] %v314
    %331 = vst [vmem:[#allocation2 + $0x28] sm:$0xff] %v315
    %332 = vst [vmem:[#allocation2 + $0x30] sm:$0xff] %v316
    %333 = vst [vmem:[#allocation2 + $0x38] sm:$0xff] %v317
    %334 = vst [vmem:[#allocation2 + $0x40] sm:$0xff] %v318
    %335 = vst [vmem:[#allocation2 + $0x48] sm:$0xff] %v319
    %336 = vst [vmem:[#allocation2 + $0x50] sm:$0xff] %v320
    %337 = vst [vmem:[#allocation2 + $0x58] sm:$0xff] %v321
    %338 = vst [vmem:[#allocation2 + $0x60] sm:$0xff] %v322
    %339 = vst [vmem:[#allocation2 + $0x68] sm:$0xff] %v323
    %340 = vst [vmem:[#allocation2 + $0x70] sm:$0xff] %v324
    %341 = vst [vmem:[#allocation2 + $0x78] sm:$0xff] %v325
    // Predicated region
    $region26: #{tpu_custom_call.1} parent=1 // pred_check
      %p342 = pneg %p44
    $region27: #{tpu_custom_call.1} parent=1 // pred_check_branch
      %344 = sbr.rel (%p342) target = $region29
    $region28: #{tpu_custom_call.1} parent=1 // pred_region
      %v345 = vld [vmem:[#allocation2] sm:$0xff]
      %v346 = vld [vmem:[#allocation2 + $0x8] sm:$0xff]
      %v347 = vld [vmem:[#allocation2 + $0x10] sm:$0xff]
      %v348 = vld [vmem:[#allocation2 + $0x18] sm:$0xff]
      %v349 = vld [vmem:[#allocation2 + $0x20] sm:$0xff]
      %v350 = vld [vmem:[#allocation2 + $0x28] sm:$0xff]
      %v351 = vld [vmem:[#allocation2 + $0x30] sm:$0xff]
      %v352 = vld [vmem:[#allocation2 + $0x38] sm:$0xff]
      %v353 = vld [vmem:[#allocation2 + $0x40] sm:$0xff]
      %v354 = vld [vmem:[#allocation2 + $0x48] sm:$0xff]
      %v355 = vld [vmem:[#allocation2 + $0x50] sm:$0xff]
      %v356 = vld [vmem:[#allocation2 + $0x58] sm:$0xff]
      %v357 = vld [vmem:[#allocation2 + $0x60] sm:$0xff]
      %v358 = vld [vmem:[#allocation2 + $0x68] sm:$0xff]
      %v359 = vld [vmem:[#allocation2 + $0x70] sm:$0xff]
      %v360 = vld [vmem:[#allocation2 + $0x78] sm:$0xff]
      %v361 = vld [vmem:[%s2] sm:$0x1]
      %v363 = vlaneseq
      %v364 = vshrl.u32 %v363, 7
      %v365 = vsub.s32 0, %v364
      %v366 = vrot.slane %v361, %v365
      %v368 = vadd.f32 %v345, %v366
      %v369 = vadd.f32 %v346, %v366
      %v370 = vadd.f32 %v347, %v366
      %v371 = vadd.f32 %v348, %v366
      %v372 = vadd.f32 %v349, %v366
      %v373 = vadd.f32 %v350, %v366
      %v374 = vadd.f32 %v351, %v366
      %v375 = vadd.f32 %v352, %v366
      %v376 = vadd.f32 %v353, %v366
      %v377 = vadd.f32 %v354, %v366
      %v378 = vadd.f32 %v355, %v366
      %v379 = vadd.f32 %v356, %v366
      %v380 = vadd.f32 %v357, %v366
      %v381 = vadd.f32 %v358, %v366
      %v382 = vadd.f32 %v359, %v366
      %v383 = vadd.f32 %v360, %v366
      %v384 = vmax.f32 %v368, 0.0
      %v385 = vmax.f32 %v369, 0.0
      %v386 = vmax.f32 %v370, 0.0
      %v387 = vmax.f32 %v371, 0.0
      %v388 = vmax.f32 %v372, 0.0
      %v389 = vmax.f32 %v373, 0.0
      %v390 = vmax.f32 %v374, 0.0
      %v391 = vmax.f32 %v375, 0.0
      %v392 = vmax.f32 %v376, 0.0
      %v393 = vmax.f32 %v377, 0.0
      %v394 = vmax.f32 %v378, 0.0
      %v395 = vmax.f32 %v379, 0.0
      %v396 = vmax.f32 %v380, 0.0
      %v397 = vmax.f32 %v381, 0.0
      %v398 = vmax.f32 %v382, 0.0
      %v399 = vmax.f32 %v383, 0.0
      %400 = vst [vmem:[#allocation8] sm:$0xff] %v384
      %401 = vst [vmem:[#allocation8 + $0x8] sm:$0xff] %v385
      %402 = vst [vmem:[#allocation8 + $0x10] sm:$0xff] %v386
      %403 = vst [vmem:[#allocation8 + $0x18] sm:$0xff] %v387
      %404 = vst [vmem:[#allocation8 + $0x20] sm:$0xff] %v388
      %405 = vst [vmem:[#allocation8 + $0x28] sm:$0xff] %v389
      %406 = vst [vmem:[#allocation8 + $0x30] sm:$0xff] %v390
      %407 = vst [vmem:[#allocation8 + $0x38] sm:$0xff] %v391
      %408 = vst [vmem:[#allocation8 + $0x40] sm:$0xff] %v392
      %409 = vst [vmem:[#allocation8 + $0x48] sm:$0xff] %v393
      %410 = vst [vmem:[#allocation8 + $0x50] sm:$0xff] %v394
      %411 = vst [vmem:[#allocation8 + $0x58] sm:$0xff] %v395
      %412 = vst [vmem:[#allocation8 + $0x60] sm:$0xff] %v396
      %413 = vst [vmem:[#allocation8 + $0x68] sm:$0xff] %v397
      %414 = vst [vmem:[#allocation8 + $0x70] sm:$0xff] %v398
      %415 = vst [vmem:[#allocation8 + $0x78] sm:$0xff] %v399
    $region29: #{tpu_custom_call.1} parent=1 // pred_fallthru
      _
    // Predicated region
    $region30: #{tpu_custom_call.1} parent=1 // pred_check
      _
    $region31: #{tpu_custom_call.1} parent=1 // pred_check_branch
      %417 = sbr.rel (0) target = $region33
    $region32: #{tpu_custom_call.1} parent=1 // pred_region
      %s419 = ssub.s32 2048, 2048
      %420 = vsyncadd [#allocation5], %s419
      %s421 = sshll.u32 [#allocation8], 4
      %s422 = int_to_ptr.vmem [resolvable:$true] %s421
      %427 = dma.vmem_to_hbm [thread:$0]  %s422, 2048, %s3, [#allocation5], 128, 128, 8
    $region33: #{tpu_custom_call.1} parent=1 // pred_fallthru
      _
    // Predicated region
    $region34: #{tpu_custom_call.1} parent=1 // pred_check
      _
    $region35: #{tpu_custom_call.1} parent=1 // pred_check_branch
      %429 = sbr.rel (0) target = $region37
    $region36: #{tpu_custom_call.1} parent=1 // pred_region
      %430 = dma.done [#allocation5], 2048
    $region37: #{tpu_custom_call.1} parent=1 // pred_fallthru
      _
    %431 = vsyncpa [#allocation4], 1
    %432 = vsyncpa [#allocation7], 1
    %433 = vsyncpa [#allocation5], 1

</llo_original>
